<compile_context>
chip_gen: v5e
topology: v5e:2x2
jax: 0.10.0
libtpu: 0.0.40
codegen_flags: <defaults>
</compile_context>

<pallas_src>
import functools

import jax
import jax.numpy as jnp
from jax.experimental import pallas as pl
from jax.experimental.pallas import tpu as pltpu


def _symmetric_ref(x, lower=True):
    """Plain-JAX reference, identical to the PyTorch Symmetric.frame."""
    if lower:
        return jnp.tril(x, 0) + jnp.swapaxes(jnp.tril(x, -1), -1, -2)
    return jnp.triu(x, 0) + jnp.swapaxes(jnp.triu(x, 1), -1, -2)


def _symmetric_block_kernel(x_ref, o_ref, *, lower):
    """Produce one (tile_b, tn, tn) output block.

    The input BlockSpec already fetched the *source-triangle* block for this
    output block (see in_map below), so the body is:
      * block strictly in the kept half     -> verbatim copy        (VPU-free)
      * block strictly in the mirrored half -> one XLU tile transpose
      * diagonal block                      -> select(kept, x, x^T)
    Only one branch fires per grid step; compute is fully hidden under DMA.
    """
    i = pl.program_id(1)
    j = pl.program_id(2)
    plain = (i > j) if lower else (i < j)
    mirror = (i < j) if lower else (i > j)

    @pl.when(plain)
    def _():
        o_ref[...] = x_ref[...]

    @pl.when(mirror)
    def _():
        o_ref[...] = jnp.swapaxes(x_ref[...], -1, -2)

    @pl.when(i == j)
    def _():
        x = x_ref[...]
        xt = jnp.swapaxes(x, -1, -2)                   # XLU minor-dims transpose
        tn = x.shape[-1]
        row = jax.lax.broadcasted_iota(jnp.int32, (tn, tn), 0)
        col = jax.lax.broadcasted_iota(jnp.int32, (tn, tn), 1)
        keep = (row >= col) if lower else (row <= col)  # local idx ok: i == j
        o_ref[...] = jnp.where(keep, x, xt)


def _vmem_capacity_bytes(default=64 * 1024 * 1024):
    """Physical VMEM per TensorCore; fall back to the v7x minimum (64 MiB)."""
    try:
        cap = int(pltpu.get_tpu_info().vmem_capacity_bytes)
        if cap > 0:
            return cap
    except Exception:
        pass
    return default


def symmetric_forward(x, lower=True, *, force_pallas=False,
                      min_pallas_elements=1 << 14,
                      lane_dense_min_n=128,
                      max_whole_matrix_n=512,
                      tile_n=512,
                      vmem_target_bytes=4 << 20):
    """Symmetric.forward: symmetrize the last two (square) dims of x."""
    if x.ndim < 2:
        raise ValueError(
            "Cannot instantiate Symmetric on a tensor of less than 2 "
            "dimensions. Got a tensor of size {}".format(tuple(x.shape)))
    if x.shape[-2] != x.shape[-1]:
        raise ValueError(
            "The Symmetric parametrization can just be applied to square "
            "matrices. Got a tensor of size {}".format(tuple(x.shape)))

    n = int(x.shape[-1])

    # Dispatch gate: tiny totals (launch/DMA setup dominates) or lane-sparse
    # matrices (n < 128 -> masked partial stores) go to XLA unless forced.
    if not force_pallas and (x.size < min_pallas_elements
                             or n < lane_dense_min_n):
        return _symmetric_ref(x, lower)

    batch_shape = x.shape[:-2]
    B = 1
    for d in batch_shape:
        B *= int(d)
    B = max(B, 1)
    x3d = x.reshape(B, n, n)

    itemsize = jnp.dtype(x.dtype).itemsize
    mat_bytes = n * n * itemsize

    if n <= max_whole_matrix_n:
        # Whole matrix in the last two block dims (allowed: block == full dims),
        # tile the batch axis.
        tn = n
        nt = 1
        max_tile_b = max(1, vmem_target_bytes // max(mat_bytes, 1))   # VMEM cap
        min_tile_b = max(1, (1 << 20) // max(mat_bytes, 1))           # >=1 MiB tiles
        steps_tile_b = max(1, pl.cdiv(B, 8))                          # >=8 steps (megacore)
        tile_b = min(B, max(min(max_tile_b, steps_tile_b),
                            min(min_tile_b, max_tile_b)))
    else:
        # (row, col) tiling: VMEM stays at a few MiB independent of n.
        tn = max(128, (min(tile_n, n) // 128) * 128)   # multiple of (8, 128)
        nt = pl.cdiv(n, tn)
        tile_b = 1

    grid = (pl.cdiv(B, tile_b), nt, nt)

    # Each output block (i, j) needs exactly one input block: the one in the
    # source triangle.  lower=True keeps the lower triangle -> (max, min);
    # lower=False keeps the upper triangle -> (min, max).
    if lower:
        def in_map(b, i, j):
            return (b, jnp.maximum(i, j), jnp.minimum(i, j))
    else:
        def in_map(b, i, j):
            return (b, jnp.minimum(i, j), jnp.maximum(i, j))

    def out_map(b, i, j):
        return (b, i, j)

    # VMEM budget: 2x double-buffered input + 2x output tiles, ~3x tile for the
    # transpose/select temporaries, the (tn, tn) int32 iotas + mask, headroom.
    tile_bytes = tile_b * tn * tn * itemsize
    mask_bytes = 3 * tn * tn * 4
    need = 7 * tile_bytes + mask_bytes + (2 << 20)
    cap = int(0.85 * _vmem_capacity_bytes())
    vmem_limit = int(min(max(need, 32 << 20), cap))

    out3d = pl.pallas_call(
        functools.partial(_symmetric_block_kernel, lower=bool(lower)),
        out_shape=jax.ShapeDtypeStruct((B, n, n), x.dtype),
        grid_spec=pltpu.PrefetchScalarGridSpec(
            num_scalar_prefetch=0,
            grid=grid,
            in_specs=[pl.BlockSpec((tile_b, tn, tn), in_map)],
            out_specs=pl.BlockSpec((tile_b, tn, tn), out_map),
        ),
        compiler_params=pltpu.CompilerParams(
            dimension_semantics=("parallel", "parallel", "parallel"),
            vmem_limit_bytes=vmem_limit,
        ),
    )(x3d)

    return out3d.reshape(x.shape)


if __name__ == "__main__":
    key = jax.random.PRNGKey(0)
    k1, k2, k3 = jax.random.split(key, 3)

    # 1) Module-shaped small input (batch=2, channels=4, n=16).  n is
    #    lane-sparse so production dispatch would fall back to XLA; force the
    #    Pallas whole-matrix path here to exercise the kernel itself.
    x_small = jax.random.normal(k1, (2, 4, 16, 16), dtype=jnp.float32)

    out_l = jax.block_until_ready(
        symmetric_forward(x_small, lower=True, force_pallas=True))
    ref_l = _symmetric_ref(x_small, lower=True)
    assert out_l.shape == x_small.shape
    assert jnp.allclose(out_l, ref_l, atol=1e-6, rtol=1e-6), "lower: mismatch"
    assert jnp.allclose(out_l, jnp.swapaxes(out_l, -1, -2), atol=1e-6), "not symmetric"
    assert jnp.allclose(jnp.tril(out_l), jnp.tril(x_small), atol=1e-6), "tril changed"

    out_u = jax.block_until_ready(
        symmetric_forward(x_small, lower=False, force_pallas=True))
    ref_u = _symmetric_ref(x_small, lower=False)
    assert jnp.allclose(out_u, ref_u, atol=1e-6, rtol=1e-6), "upper: mismatch"
    assert jnp.allclose(jnp.triu(out_u), jnp.triu(x_small), atol=1e-6), "triu changed"

    # 2) Lane-dense, (row, col)-tiled path with ragged edge blocks:
    #    n = 320 with 128x128 tiles -> 3x3 block grid, last block ragged (64),
    #    mixing copy / transpose / diagonal-select blocks.
    x_big = jax.random.normal(k2, (2, 320, 320), dtype=jnp.float32)
    for lower in (True, False):
        out_b = jax.block_until_ready(
            symmetric_forward(x_big, lower=lower,
                              max_whole_matrix_n=128, tile_n=128))
        ref_b = _symmetric_ref(x_big, lower=lower)
        assert jnp.allclose(out_b, ref_b, atol=1e-6, rtol=1e-6), "tiled: mismatch"
        assert jnp.allclose(out_b, jnp.swapaxes(out_b, -1, -2), atol=1e-6), \
            "tiled: not symmetric"

    # 3) Dispatch sanity: tiny / lane-sparse inputs fall back to XLA.
    x_tiny = jax.random.normal(k3, (3, 8, 8), dtype=jnp.float32)
    assert jnp.allclose(symmetric_forward(x_tiny), _symmetric_ref(x_tiny),
                        atol=1e-6), "fallback mismatch"

    print("KERNEL_OK")
</pallas_src>

<mosaic_0001>
module attributes {stable_mosaic.version = 11 : i64} {
  func.func @_symmetric_block_kernel(%arg0: i32, %arg1: i32, %arg2: i32, %arg3: memref<8x16x16xf32, #tpu.memory_space<vmem>>, %arg4: memref<8x16x16xf32, #tpu.memory_space<vmem>>) attributes {dimension_semantics = [#tpu.dimension_semantics<parallel>, #tpu.dimension_semantics<parallel>, #tpu.dimension_semantics<parallel>], iteration_bounds = array<i64: 1, 1, 1>, scalar_prefetch = 0 : i64, scratch_operands = 0 : i64, tpu.core_type = #tpu.core_type<tc>, window_params = [{transform_indices = @transform_0, window_bounds = array<i64: 8, 16, 16>}, {transform_indices = @transform_1, window_bounds = array<i64: 8, 16, 16>}]} {
    %0 = arith.cmpi sgt, %arg1, %arg2 : i32
    %1 = arith.cmpi slt, %arg1, %arg2 : i32
    %2 = arith.extui %0 : i1 to i32
    %c0_i32 = arith.constant 0 : i32
    %3 = arith.cmpi ne, %2, %c0_i32 : i32
    scf.if %3 {
      %c0 = arith.constant 0 : index
      %c0_2 = arith.constant 0 : index
      %c0_3 = arith.constant 0 : index
      %9 = vector.load %arg3[%c0, %c0_2, %c0_3] : memref<8x16x16xf32, #tpu.memory_space<vmem>>, vector<8x16x16xf32>
      %c0_4 = arith.constant 0 : index
      %c0_5 = arith.constant 0 : index
      %c0_6 = arith.constant 0 : index
      %10 = vector.load %arg4[%c0_4, %c0_5, %c0_6] : memref<8x16x16xf32, #tpu.memory_space<vmem>>, vector<8x16x16xf32>
      tpu.vector_store %arg4[%c0_4, %c0_5, %c0_6], %9 {strides = array<i32>} : memref<8x16x16xf32, #tpu.memory_space<vmem>>, vector<8x16x16xf32>,
    } else {
    }
    %4 = arith.extui %1 : i1 to i32
    %c0_i32_0 = arith.constant 0 : i32
    %5 = arith.cmpi ne, %4, %c0_i32_0 : i32
    scf.if %5 {
      %c0 = arith.constant 0 : index
      %c0_2 = arith.constant 0 : index
      %c0_3 = arith.constant 0 : index
      %9 = vector.load %arg3[%c0, %c0_2, %c0_3] : memref<8x16x16xf32, #tpu.memory_space<vmem>>, vector<8x16x16xf32>
      %10 = tpu.transpose %9, [0, 2, 1] : vector<8x16x16xf32> -> vector<8x16x16xf32>
      %c0_4 = arith.constant 0 : index
      %c0_5 = arith.constant 0 : index
      %c0_6 = arith.constant 0 : index
      %11 = vector.load %arg4[%c0_4, %c0_5, %c0_6] : memref<8x16x16xf32, #tpu.memory_space<vmem>>, vector<8x16x16xf32>
      tpu.vector_store %arg4[%c0_4, %c0_5, %c0_6], %10 {strides = array<i32>} : memref<8x16x16xf32, #tpu.memory_space<vmem>>, vector<8x16x16xf32>,
    } else {
    }
    %6 = arith.cmpi eq, %arg1, %arg2 : i32
    %7 = arith.extui %6 : i1 to i32
    %c0_i32_1 = arith.constant 0 : i32
    %8 = arith.cmpi ne, %7, %c0_i32_1 : i32
    scf.if %8 {
      %c0 = arith.constant 0 : index
      %c0_2 = arith.constant 0 : index
      %c0_3 = arith.constant 0 : index
      %9 = vector.load %arg3[%c0, %c0_2, %c0_3] : memref<8x16x16xf32, #tpu.memory_space<vmem>>, vector<8x16x16xf32>
      %10 = tpu.transpose %9, [0, 2, 1] : vector<8x16x16xf32> -> vector<8x16x16xf32>
      %11 = tpu.iota {dimensions = array<i32: 0>} : vector<16x16xi32>
      %12 = tpu.iota {dimensions = array<i32: 1>} : vector<16x16xi32>
      %13 = arith.cmpi sge, %11, %12 : vector<16x16xi32>
      %14 = vector.shape_cast %13 : vector<16x16xi1> to vector<1x16x16xi1>
      %15 = vector.broadcast %14 : vector<1x16x16xi1> to vector<8x16x16xi1>
      %16 = arith.select %15, %9, %10 : vector<8x16x16xi1>, vector<8x16x16xf32>
      %c0_4 = arith.constant 0 : index
      %c0_5 = arith.constant 0 : index
      %c0_6 = arith.constant 0 : index
      %17 = vector.load %arg4[%c0_4, %c0_5, %c0_6] : memref<8x16x16xf32, #tpu.memory_space<vmem>>, vector<8x16x16xf32>
      tpu.vector_store %arg4[%c0_4, %c0_5, %c0_6], %16 {strides = array<i32>} : memref<8x16x16xf32, #tpu.memory_space<vmem>>, vector<8x16x16xf32>,
    } else {
    }
    return
  }
  func.func @transform_0(%arg0: i32, %arg1: i32, %arg2: i32) -> (i32, i32, i32) {
    %0 = arith.maxsi %arg1, %arg2 : i32
    %1 = arith.minsi %arg1, %arg2 : i32
    %c0_i32 = arith.constant 0 : i32
    return %arg0, %0, %1 : i32, i32, i32
  }
  func.func @transform_1(%arg0: i32, %arg1: i32, %arg2: i32) -> (i32, i32, i32) {
    %c0_i32 = arith.constant 0 : i32
    return %arg0, %arg1, %arg2 : i32, i32, i32
  }
}

</mosaic_0001>

<llo_original>
// kernel: tpu_custom_call.1
$region0: #{tpu_custom_call.1}
  #allocation0 [shape = 'u32[]', space=smem, size = 0x4, offset = 0x4, fixed_abs, tag = 'smem constant byte address 0x4 - core index']
  #allocation1 [shape = 'u32[72,128]{1,0:T(1,128)}', space=vmem, size = 0x9000, scoped, tag = 'internal scratch']
  %s0 = inlined_call_operand.hbm [shape: f32[8,16,16], index: 0, kind: input, shape index: {}]
  %s1 = inlined_call_operand.hbm [shape: f32[8,16,16], index: 1, kind: output, shape index: {}]
  %s2 = sld [smem:[#allocation0]]
  $region30: #{tpu_custom_call.1} parent=0
    _
  %s4 = ssub.s32 1, %s2
  %s5 = scalar_select 0, %s4, %s2
  $region1: #{tpu_custom_call.1} parent=0
    #allocation2 [shape = 'u8[65536]{0}', space=vmem, size = 0x10000, scoped, tag = 'input window, operand 0, single buffered']
    #allocation3 [shape = 's32[1]{0}', space=sflag, size = 0x4, scoped, tag = 'scoped memory for tpu_custom_call.1']
    #allocation4 [shape = 's32[1]{0}', space=sflag, size = 0x4, scoped, tag = 'scoped memory for tpu_custom_call.1']
    #allocation5 [shape = 'u8[65536]{0}', space=vmem, size = 0x10000, scoped, tag = 'output window, operand 0, single buffered']
    %6 = vsyncpa [#allocation3], 0
    %7 = vsyncpa [#allocation4], 0
    // Predicated region
    $region2: #{tpu_custom_call.1} parent=1 // pred_check
      _
    $region3: #{tpu_custom_call.1} parent=1 // pred_check_branch
      %9 = sbr.rel (0) target = $region5
    $region4: #{tpu_custom_call.1} parent=1 // pred_region
      %11 = vsyncadd [#allocation3], 0
      %s12 = sshll.u32 %s0, 4
      %s13 = int_to_ptr.hbm [resolvable:$true] %s12
      %s14 = sshll.u32 [#allocation2], 4
      %s15 = int_to_ptr.vmem [resolvable:$true] %s14
      %20 = dma.hbm_to_vmem [thread:$0]  %s13, 2048, %s15, [#allocation3], 128, 128, 8
    $region5: #{tpu_custom_call.1} parent=1 // pred_fallthru
      _
    // Predicated region
    $region6: #{tpu_custom_call.1} parent=1 // pred_check
      _
    $region7: #{tpu_custom_call.1} parent=1 // pred_check_branch
      %22 = sbr.rel (0) target = $region9
    $region8: #{tpu_custom_call.1} parent=1 // pred_region
      %24 = dma.done [#allocation3], 2048
    $region9: #{tpu_custom_call.1} parent=1 // pred_fallthru
      _
    %p25 = scmp.gt.s32.totalorder 0, 0
    %p26 = scmp.lt.s32.totalorder 0, 0
    // Predicated region
    $region10: #{tpu_custom_call.1} parent=1 // pred_check
      %p27 = pneg %p25
    $region11: #{tpu_custom_call.1} parent=1 // pred_check_branch
      %29 = sbr.rel (%p27) target = $region13
    $region12: #{tpu_custom_call.1} parent=1 // pred_region
      %v30 = vld [vmem:[#allocation2] sm:$0xff]
      %v31 = vld [vmem:[#allocation2 + $0x8] sm:$0xff]
      %v32 = vld [vmem:[#allocation2 + $0x10] sm:$0xff]
      %v33 = vld [vmem:[#allocation2 + $0x18] sm:$0xff]
      %v34 = vld [vmem:[#allocation2 + $0x20] sm:$0xff]
      %v35 = vld [vmem:[#allocation2 + $0x28] sm:$0xff]
      %v36 = vld [vmem:[#allocation2 + $0x30] sm:$0xff]
      %v37 = vld [vmem:[#allocation2 + $0x38] sm:$0xff]
      %v38 = vld [vmem:[#allocation2 + $0x40] sm:$0xff]
      %v39 = vld [vmem:[#allocation2 + $0x48] sm:$0xff]
      %v40 = vld [vmem:[#allocation2 + $0x50] sm:$0xff]
      %v41 = vld [vmem:[#allocation2 + $0x58] sm:$0xff]
      %v42 = vld [vmem:[#allocation2 + $0x60] sm:$0xff]
      %v43 = vld [vmem:[#allocation2 + $0x68] sm:$0xff]
      %v44 = vld [vmem:[#allocation2 + $0x70] sm:$0xff]
      %v45 = vld [vmem:[#allocation2 + $0x78] sm:$0xff]
      %vm46 = vcmask 130048
      %47 = vst.msk [vmem:[#allocation5] sm:$0xff] %vm46, %v30
      %48 = vst.msk [vmem:[#allocation5 + $0x8] sm:$0xff] %vm46, %v31
      %49 = vst.msk [vmem:[#allocation5 + $0x10] sm:$0xff] %vm46, %v32
      %50 = vst.msk [vmem:[#allocation5 + $0x18] sm:$0xff] %vm46, %v33
      %51 = vst.msk [vmem:[#allocation5 + $0x20] sm:$0xff] %vm46, %v34
      %52 = vst.msk [vmem:[#allocation5 + $0x28] sm:$0xff] %vm46, %v35
      %53 = vst.msk [vmem:[#allocation5 + $0x30] sm:$0xff] %vm46, %v36
      %54 = vst.msk [vmem:[#allocation5 + $0x38] sm:$0xff] %vm46, %v37
      %55 = vst.msk [vmem:[#allocation5 + $0x40] sm:$0xff] %vm46, %v38
      %56 = vst.msk [vmem:[#allocation5 + $0x48] sm:$0xff] %vm46, %v39
      %57 = vst.msk [vmem:[#allocation5 + $0x50] sm:$0xff] %vm46, %v40
      %58 = vst.msk [vmem:[#allocation5 + $0x58] sm:$0xff] %vm46, %v41
      %59 = vst.msk [vmem:[#allocation5 + $0x60] sm:$0xff] %vm46, %v42
      %60 = vst.msk [vmem:[#allocation5 + $0x68] sm:$0xff] %vm46, %v43
      %61 = vst.msk [vmem:[#allocation5 + $0x70] sm:$0xff] %vm46, %v44
      %62 = vst.msk [vmem:[#allocation5 + $0x78] sm:$0xff] %vm46, %v45
    $region13: #{tpu_custom_call.1} parent=1 // pred_fallthru
      _
    // Predicated region
    $region14: #{tpu_custom_call.1} parent=1 // pred_check
      %p63 = pneg %p26
    $region15: #{tpu_custom_call.1} parent=1 // pred_check_branch
      %65 = sbr.rel (%p63) target = $region17
    $region16: #{tpu_custom_call.1} parent=1 // pred_region
      %v66 = vld [vmem:[#allocation2] sm:$0xff]
      %v67 = vld [vmem:[#allocation2 + $0x8] sm:$0xff]
      %v68 = vld [vmem:[#allocation2 + $0x10] sm:$0xff]
      %v69 = vld [vmem:[#allocation2 + $0x18] sm:$0xff]
      %v70 = vld [vmem:[#allocation2 + $0x20] sm:$0xff]
      %v71 = vld [vmem:[#allocation2 + $0x28] sm:$0xff]
      %v72 = vld [vmem:[#allocation2 + $0x30] sm:$0xff]
      %v73 = vld [vmem:[#allocation2 + $0x38] sm:$0xff]
      %v74 = vld [vmem:[#allocation2 + $0x40] sm:$0xff]
      %v75 = vld [vmem:[#allocation2 + $0x48] sm:$0xff]
      %v76 = vld [vmem:[#allocation2 + $0x50] sm:$0xff]
      %v77 = vld [vmem:[#allocation2 + $0x58] sm:$0xff]
      %v78 = vld [vmem:[#allocation2 + $0x60] sm:$0xff]
      %v79 = vld [vmem:[#allocation2 + $0x68] sm:$0xff]
      %v80 = vld [vmem:[#allocation2 + $0x70] sm:$0xff]
      %v81 = vld [vmem:[#allocation2 + $0x78] sm:$0xff]
      %82 = vxpose.xlu0.b32.start [1/16] %v66, 128
      %83 = vxpose.xlu0.b32.cont [2/16] %v67, 128
      %84 = vxpose.xlu0.b32.cont [3/16] 0.0, 128
      %85 = vxpose.xlu0.b32.cont [4/16] 0.0, 128
      %86 = vxpose.xlu0.b32.cont [5/16] 0.0, 128
      %87 = vxpose.xlu0.b32.cont [6/16] 0.0, 128
      %88 = vxpose.xlu0.b32.cont [7/16] 0.0, 128
      %89 = vxpose.xlu0.b32.cont [8/16] 0.0, 128
      %90 = vxpose.xlu0.b32.cont [9/16] 0.0, 128
      %91 = vxpose.xlu0.b32.cont [10/16] 0.0, 128
      %92 = vxpose.xlu0.b32.cont [11/16] 0.0, 128
      %93 = vxpose.xlu0.b32.cont [12/16] 0.0, 128
      %94 = vxpose.xlu0.b32.cont [13/16] 0.0, 128
      %95 = vxpose.xlu0.b32.cont [14/16] 0.0, 128
      %96 = vxpose.xlu0.b32.cont [15/16] 0.0, 128
      %97 = vxpose.xlu0.b32.end [16/16] 0.0, 128
      %v98 = vpop.trf.xlu0
      %v99 = vpop.trf.xlu0
      %v100 = vpop.trf.xlu0
      %v101 = vpop.trf.xlu0
      %v102 = vpop.trf.xlu0
      %v103 = vpop.trf.xlu0
      %v104 = vpop.trf.xlu0
      %v105 = vpop.trf.xlu0
      %v106 = vpop.trf.xlu0
      %v107 = vpop.trf.xlu0
      %v108 = vpop.trf.xlu0
      %v109 = vpop.trf.xlu0
      %v110 = vpop.trf.xlu0
      %v111 = vpop.trf.xlu0
      %v112 = vpop.trf.xlu0
      %v113 = vpop.trf.xlu0
      %114 = vxpose.xlu0.b32.start [1/16] %v68, 128
      %115 = vxpose.xlu0.b32.cont [2/16] %v69, 128
      %116 = vxpose.xlu0.b32.cont [3/16] 0.0, 128
      %117 = vxpose.xlu0.b32.cont [4/16] 0.0, 128
      %118 = vxpose.xlu0.b32.cont [5/16] 0.0, 128
      %119 = vxpose.xlu0.b32.cont [6/16] 0.0, 128
      %120 = vxpose.xlu0.b32.cont [7/16] 0.0, 128
      %121 = vxpose.xlu0.b32.cont [8/16] 0.0, 128
      %122 = vxpose.xlu0.b32.cont [9/16] 0.0, 128
      %123 = vxpose.xlu0.b32.cont [10/16] 0.0, 128
      %124 = vxpose.xlu0.b32.cont [11/16] 0.0, 128
      %125 = vxpose.xlu0.b32.cont [12/16] 0.0, 128
      %126 = vxpose.xlu0.b32.cont [13/16] 0.0, 128
      %127 = vxpose.xlu0.b32.cont [14/16] 0.0, 128
      %128 = vxpose.xlu0.b32.cont [15/16] 0.0, 128
      %129 = vxpose.xlu0.b32.end [16/16] 0.0, 128
      %v130 = vpop.trf.xlu0
      %v131 = vpop.trf.xlu0
      %v132 = vpop.trf.xlu0
      %v133 = vpop.trf.xlu0
      %v134 = vpop.trf.xlu0
      %v135 = vpop.trf.xlu0
      %v136 = vpop.trf.xlu0
      %v137 = vpop.trf.xlu0
      %v138 = vpop.trf.xlu0
      %v139 = vpop.trf.xlu0
      %v140 = vpop.trf.xlu0
      %v141 = vpop.trf.xlu0
      %v142 = vpop.trf.xlu0
      %v143 = vpop.trf.xlu0
      %v144 = vpop.trf.xlu0
      %v145 = vpop.trf.xlu0
      %146 = vxpose.xlu0.b32.start [1/16] %v70, 128
      %147 = vxpose.xlu0.b32.cont [2/16] %v71, 128
      %148 = vxpose.xlu0.b32.cont [3/16] 0.0, 128
      %149 = vxpose.xlu0.b32.cont [4/16] 0.0, 128
      %150 = vxpose.xlu0.b32.cont [5/16] 0.0, 128
      %151 = vxpose.xlu0.b32.cont [6/16] 0.0, 128
      %152 = vxpose.xlu0.b32.cont [7/16] 0.0, 128
      %153 = vxpose.xlu0.b32.cont [8/16] 0.0, 128
      %154 = vxpose.xlu0.b32.cont [9/16] 0.0, 128
      %155 = vxpose.xlu0.b32.cont [10/16] 0.0, 128
      %156 = vxpose.xlu0.b32.cont [11/16] 0.0, 128
      %157 = vxpose.xlu0.b32.cont [12/16] 0.0, 128
      %158 = vxpose.xlu0.b32.cont [13/16] 0.0, 128
      %159 = vxpose.xlu0.b32.cont [14/16] 0.0, 128
      %160 = vxpose.xlu0.b32.cont [15/16] 0.0, 128
      %161 = vxpose.xlu0.b32.end [16/16] 0.0, 128
      %v162 = vpop.trf.xlu0
      %v163 = vpop.trf.xlu0
      %v164 = vpop.trf.xlu0
      %v165 = vpop.trf.xlu0
      %v166 = vpop.trf.xlu0
      %v167 = vpop.trf.xlu0
      %v168 = vpop.trf.xlu0
      %v169 = vpop.trf.xlu0
      %v170 = vpop.trf.xlu0
      %v171 = vpop.trf.xlu0
      %v172 = vpop.trf.xlu0
      %v173 = vpop.trf.xlu0
      %v174 = vpop.trf.xlu0
      %v175 = vpop.trf.xlu0
      %v176 = vpop.trf.xlu0
      %v177 = vpop.trf.xlu0
      %178 = vxpose.xlu0.b32.start [1/16] %v72, 128
      %179 = vxpose.xlu0.b32.cont [2/16] %v73, 128
      %180 = vxpose.xlu0.b32.cont [3/16] 0.0, 128
      %181 = vxpose.xlu0.b32.cont [4/16] 0.0, 128
      %182 = vxpose.xlu0.b32.cont [5/16] 0.0, 128
      %183 = vxpose.xlu0.b32.cont [6/16] 0.0, 128
      %184 = vxpose.xlu0.b32.cont [7/16] 0.0, 128
      %185 = vxpose.xlu0.b32.cont [8/16] 0.0, 128
      %186 = vxpose.xlu0.b32.cont [9/16] 0.0, 128
      %187 = vxpose.xlu0.b32.cont [10/16] 0.0, 128
      %188 = vxpose.xlu0.b32.cont [11/16] 0.0, 128
      %189 = vxpose.xlu0.b32.cont [12/16] 0.0, 128
      %190 = vxpose.xlu0.b32.cont [13/16] 0.0, 128
      %191 = vxpose.xlu0.b32.cont [14/16] 0.0, 128
      %192 = vxpose.xlu0.b32.cont [15/16] 0.0, 128
      %193 = vxpose.xlu0.b32.end [16/16] 0.0, 128
      %v194 = vpop.trf.xlu0
      %v195 = vpop.trf.xlu0
      %v196 = vpop.trf.xlu0
      %v197 = vpop.trf.xlu0
      %v198 = vpop.trf.xlu0
      %v199 = vpop.trf.xlu0
      %v200 = vpop.trf.xlu0
      %v201 = vpop.trf.xlu0
      %v202 = vpop.trf.xlu0
      %v203 = vpop.trf.xlu0
      %v204 = vpop.trf.xlu0
      %v205 = vpop.trf.xlu0
      %v206 = vpop.trf.xlu0
      %v207 = vpop.trf.xlu0
      %v208 = vpop.trf.xlu0
      %v209 = vpop.trf.xlu0
      %210 = vxpose.xlu0.b32.start [1/16] %v74, 128
      %211 = vxpose.xlu0.b32.cont [2/16] %v75, 128
      %212 = vxpose.xlu0.b32.cont [3/16] 0.0, 128
      %213 = vxpose.xlu0.b32.cont [4/16] 0.0, 128
      %214 = vxpose.xlu0.b32.cont [5/16] 0.0, 128
      %215 = vxpose.xlu0.b32.cont [6/16] 0.0, 128
      %216 = vxpose.xlu0.b32.cont [7/16] 0.0, 128
      %217 = vxpose.xlu0.b32.cont [8/16] 0.0, 128
      %218 = vxpose.xlu0.b32.cont [9/16] 0.0, 128
      %219 = vxpose.xlu0.b32.cont [10/16] 0.0, 128
      %220 = vxpose.xlu0.b32.cont [11/16] 0.0, 128
      %221 = vxpose.xlu0.b32.cont [12/16] 0.0, 128
      %222 = vxpose.xlu0.b32.cont [13/16] 0.0, 128
      %223 = vxpose.xlu0.b32.cont [14/16] 0.0, 128
      %224 = vxpose.xlu0.b32.cont [15/16] 0.0, 128
      %225 = vxpose.xlu0.b32.end [16/16] 0.0, 128
      %v226 = vpop.trf.xlu0
      %v227 = vpop.trf.xlu0
      %v228 = vpop.trf.xlu0
      %v229 = vpop.trf.xlu0
      %v230 = vpop.trf.xlu0
      %v231 = vpop.trf.xlu0
      %v232 = vpop.trf.xlu0
      %v233 = vpop.trf.xlu0
      %v234 = vpop.trf.xlu0
      %v235 = vpop.trf.xlu0
      %v236 = vpop.trf.xlu0
      %v237 = vpop.trf.xlu0
      %v238 = vpop.trf.xlu0
      %v239 = vpop.trf.xlu0
      %v240 = vpop.trf.xlu0
      %v241 = vpop.trf.xlu0
      %242 = vxpose.xlu0.b32.start [1/16] %v76, 128
      %243 = vxpose.xlu0.b32.cont [2/16] %v77, 128
      %244 = vxpose.xlu0.b32.cont [3/16] 0.0, 128
      %245 = vxpose.xlu0.b32.cont [4/16] 0.0, 128
      %246 = vxpose.xlu0.b32.cont [5/16] 0.0, 128
      %247 = vxpose.xlu0.b32.cont [6/16] 0.0, 128
      %248 = vxpose.xlu0.b32.cont [7/16] 0.0, 128
      %249 = vxpose.xlu0.b32.cont [8/16] 0.0, 128
      %250 = vxpose.xlu0.b32.cont [9/16] 0.0, 128
      %251 = vxpose.xlu0.b32.cont [10/16] 0.0, 128
      %252 = vxpose.xlu0.b32.cont [11/16] 0.0, 128
      %253 = vxpose.xlu0.b32.cont [12/16] 0.0, 128
      %254 = vxpose.xlu0.b32.cont [13/16] 0.0, 128
      %255 = vxpose.xlu0.b32.cont [14/16] 0.0, 128
      %256 = vxpose.xlu0.b32.cont [15/16] 0.0, 128
      %257 = vxpose.xlu0.b32.end [16/16] 0.0, 128
      %v258 = vpop.trf.xlu0
      %v259 = vpop.trf.xlu0
      %v260 = vpop.trf.xlu0
      %v261 = vpop.trf.xlu0
      %v262 = vpop.trf.xlu0
      %v263 = vpop.trf.xlu0
      %v264 = vpop.trf.xlu0
      %v265 = vpop.trf.xlu0
      %v266 = vpop.trf.xlu0
      %v267 = vpop.trf.xlu0
      %v268 = vpop.trf.xlu0
      %v269 = vpop.trf.xlu0
      %v270 = vpop.trf.xlu0
      %v271 = vpop.trf.xlu0
      %v272 = vpop.trf.xlu0
      %v273 = vpop.trf.xlu0
      %274 = vxpose.xlu0.b32.start [1/16] %v78, 128
      %275 = vxpose.xlu0.b32.cont [2/16] %v79, 128
      %276 = vxpose.xlu0.b32.cont [3/16] 0.0, 128
      %277 = vxpose.xlu0.b32.cont [4/16] 0.0, 128
      %278 = vxpose.xlu0.b32.cont [5/16] 0.0, 128
      %279 = vxpose.xlu0.b32.cont [6/16] 0.0, 128
      %280 = vxpose.xlu0.b32.cont [7/16] 0.0, 128
      %281 = vxpose.xlu0.b32.cont [8/16] 0.0, 128
      %282 = vxpose.xlu0.b32.cont [9/16] 0.0, 128
      %283 = vxpose.xlu0.b32.cont [10/16] 0.0, 128
      %284 = vxpose.xlu0.b32.cont [11/16] 0.0, 128
      %285 = vxpose.xlu0.b32.cont [12/16] 0.0, 128
      %286 = vxpose.xlu0.b32.cont [13/16] 0.0, 128
      %287 = vxpose.xlu0.b32.cont [14/16] 0.0, 128
      %288 = vxpose.xlu0.b32.cont [15/16] 0.0, 128
      %289 = vxpose.xlu0.b32.end [16/16] 0.0, 128
      %v290 = vpop.trf.xlu0
      %v291 = vpop.trf.xlu0
      %v292 = vpop.trf.xlu0
      %v293 = vpop.trf.xlu0
      %v294 = vpop.trf.xlu0
      %v295 = vpop.trf.xlu0
      %v296 = vpop.trf.xlu0
      %v297 = vpop.trf.xlu0
      %v298 = vpop.trf.xlu0
      %v299 = vpop.trf.xlu0
      %v300 = vpop.trf.xlu0
      %v301 = vpop.trf.xlu0
      %v302 = vpop.trf.xlu0
      %v303 = vpop.trf.xlu0
      %v304 = vpop.trf.xlu0
      %v305 = vpop.trf.xlu0
      %306 = vxpose.xlu0.b32.start [1/16] %v80, 128
      %307 = vxpose.xlu0.b32.cont [2/16] %v81, 128
      %308 = vxpose.xlu0.b32.cont [3/16] 0.0, 128
      %309 = vxpose.xlu0.b32.cont [4/16] 0.0, 128
      %310 = vxpose.xlu0.b32.cont [5/16] 0.0, 128
      %311 = vxpose.xlu0.b32.cont [6/16] 0.0, 128
      %312 = vxpose.xlu0.b32.cont [7/16] 0.0, 128
      %313 = vxpose.xlu0.b32.cont [8/16] 0.0, 128
      %314 = vxpose.xlu0.b32.cont [9/16] 0.0, 128
      %315 = vxpose.xlu0.b32.cont [10/16] 0.0, 128
      %316 = vxpose.xlu0.b32.cont [11/16] 0.0, 128
      %317 = vxpose.xlu0.b32.cont [12/16] 0.0, 128
      %318 = vxpose.xlu0.b32.cont [13/16] 0.0, 128
      %319 = vxpose.xlu0.b32.cont [14/16] 0.0, 128
      %320 = vxpose.xlu0.b32.cont [15/16] 0.0, 128
      %321 = vxpose.xlu0.b32.end [16/16] 0.0, 128
      %v322 = vpop.trf.xlu0
      %v323 = vpop.trf.xlu0
      %v324 = vpop.trf.xlu0
      %v325 = vpop.trf.xlu0
      %v326 = vpop.trf.xlu0
      %v327 = vpop.trf.xlu0
      %v328 = vpop.trf.xlu0
      %v329 = vpop.trf.xlu0
      %v330 = vpop.trf.xlu0
      %v331 = vpop.trf.xlu0
      %v332 = vpop.trf.xlu0
      %v333 = vpop.trf.xlu0
      %v334 = vpop.trf.xlu0
      %v335 = vpop.trf.xlu0
      %v336 = vpop.trf.xlu0
      %v337 = vpop.trf.xlu0
      %vm338 = vcmask 130048
      %339 = vst.msk [vmem:[#allocation5] sm:$0xff] %vm338, %v98
      %340 = vst.msk [vmem:[#allocation5 + $0x8] sm:$0xff] %vm338, %v99
      %341 = vst.msk [vmem:[#allocation5 + $0x10] sm:$0xff] %vm338, %v130
      %342 = vst.msk [vmem:[#allocation5 + $0x18] sm:$0xff] %vm338, %v131
      %343 = vst.msk [vmem:[#allocation5 + $0x20] sm:$0xff] %vm338, %v162
      %344 = vst.msk [vmem:[#allocation5 + $0x28] sm:$0xff] %vm338, %v163
      %345 = vst.msk [vmem:[#allocation5 + $0x30] sm:$0xff] %vm338, %v194
      %346 = vst.msk [vmem:[#allocation5 + $0x38] sm:$0xff] %vm338, %v195
      %347 = vst.msk [vmem:[#allocation5 + $0x40] sm:$0xff] %vm338, %v226
      %348 = vst.msk [vmem:[#allocation5 + $0x48] sm:$0xff] %vm338, %v227
      %349 = vst.msk [vmem:[#allocation5 + $0x50] sm:$0xff] %vm338, %v258
      %350 = vst.msk [vmem:[#allocation5 + $0x58] sm:$0xff] %vm338, %v259
      %351 = vst.msk [vmem:[#allocation5 + $0x60] sm:$0xff] %vm338, %v290
      %352 = vst.msk [vmem:[#allocation5 + $0x68] sm:$0xff] %vm338, %v291
      %353 = vst.msk [vmem:[#allocation5 + $0x70] sm:$0xff] %vm338, %v322
      %354 = vst.msk [vmem:[#allocation5 + $0x78] sm:$0xff] %vm338, %v323
    $region17: #{tpu_custom_call.1} parent=1 // pred_fallthru
      _
    %p355 = scmp.eq.s32.totalorder 0, 0
    // Predicated region
    $region18: #{tpu_custom_call.1} parent=1 // pred_check
      %p356 = pneg %p355
    $region19: #{tpu_custom_call.1} parent=1 // pred_check_branch
      %358 = sbr.rel (%p356) target = $region21
    $region20: #{tpu_custom_call.1} parent=1 // pred_region
      %v359 = vld [vmem:[#allocation2] sm:$0xff]
      %v360 = vld [vmem:[#allocation2 + $0x8] sm:$0xff]
      %v361 = vld [vmem:[#allocation2 + $0x10] sm:$0xff]
      %v362 = vld [vmem:[#allocation2 + $0x18] sm:$0xff]
      %v363 = vld [vmem:[#allocation2 + $0x20] sm:$0xff]
      %v364 = vld [vmem:[#allocation2 + $0x28] sm:$0xff]
      %v365 = vld [vmem:[#allocation2 + $0x30] sm:$0xff]
      %v366 = vld [vmem:[#allocation2 + $0x38] sm:$0xff]
      %v367 = vld [vmem:[#allocation2 + $0x40] sm:$0xff]
      %v368 = vld [vmem:[#allocation2 + $0x48] sm:$0xff]
      %v369 = vld [vmem:[#allocation2 + $0x50] sm:$0xff]
      %v370 = vld [vmem:[#allocation2 + $0x58] sm:$0xff]
      %v371 = vld [vmem:[#allocation2 + $0x60] sm:$0xff]
      %v372 = vld [vmem:[#allocation2 + $0x68] sm:$0xff]
      %v373 = vld [vmem:[#allocation2 + $0x70] sm:$0xff]
      %v374 = vld [vmem:[#allocation2 + $0x78] sm:$0xff]
      %375 = vxpose.xlu0.b32.start [1/16] %v359, 128
      %376 = vxpose.xlu0.b32.cont [2/16] %v360, 128
      %377 = vxpose.xlu0.b32.cont [3/16] 0.0, 128
      %378 = vxpose.xlu0.b32.cont [4/16] 0.0, 128
      %379 = vxpose.xlu0.b32.cont [5/16] 0.0, 128
      %380 = vxpose.xlu0.b32.cont [6/16] 0.0, 128
      %381 = vxpose.xlu0.b32.cont [7/16] 0.0, 128
      %382 = vxpose.xlu0.b32.cont [8/16] 0.0, 128
      %383 = vxpose.xlu0.b32.cont [9/16] 0.0, 128
      %384 = vxpose.xlu0.b32.cont [10/16] 0.0, 128
      %385 = vxpose.xlu0.b32.cont [11/16] 0.0, 128
      %386 = vxpose.xlu0.b32.cont [12/16] 0.0, 128
      %387 = vxpose.xlu0.b32.cont [13/16] 0.0, 128
      %388 = vxpose.xlu0.b32.cont [14/16] 0.0, 128
      %389 = vxpose.xlu0.b32.cont [15/16] 0.0, 128
      %390 = vxpose.xlu0.b32.end [16/16] 0.0, 128
      %v391 = vpop.trf.xlu0
      %v392 = vpop.trf.xlu0
      %v393 = vpop.trf.xlu0
      %v394 = vpop.trf.xlu0
      %v395 = vpop.trf.xlu0
      %v396 = vpop.trf.xlu0
      %v397 = vpop.trf.xlu0
      %v398 = vpop.trf.xlu0
      %v399 = vpop.trf.xlu0
      %v400 = vpop.trf.xlu0
      %v401 = vpop.trf.xlu0
      %v402 = vpop.trf.xlu0
      %v403 = vpop.trf.xlu0
      %v404 = vpop.trf.xlu0
      %v405 = vpop.trf.xlu0
      %v406 = vpop.trf.xlu0
      %407 = vxpose.xlu0.b32.start [1/16] %v361, 128
      %408 = vxpose.xlu0.b32.cont [2/16] %v362, 128
      %409 = vxpose.xlu0.b32.cont [3/16] 0.0, 128
      %410 = vxpose.xlu0.b32.cont [4/16] 0.0, 128
      %411 = vxpose.xlu0.b32.cont [5/16] 0.0, 128
      %412 = vxpose.xlu0.b32.cont [6/16] 0.0, 128
      %413 = vxpose.xlu0.b32.cont [7/16] 0.0, 128
      %414 = vxpose.xlu0.b32.cont [8/16] 0.0, 128
      %415 = vxpose.xlu0.b32.cont [9/16] 0.0, 128
      %416 = vxpose.xlu0.b32.cont [10/16] 0.0, 128
      %417 = vxpose.xlu0.b32.cont [11/16] 0.0, 128
      %418 = vxpose.xlu0.b32.cont [12/16] 0.0, 128
      %419 = vxpose.xlu0.b32.cont [13/16] 0.0, 128
      %420 = vxpose.xlu0.b32.cont [14/16] 0.0, 128
      %421 = vxpose.xlu0.b32.cont [15/16] 0.0, 128
      %422 = vxpose.xlu0.b32.end [16/16] 0.0, 128
      %v423 = vpop.trf.xlu0
      %v424 = vpop.trf.xlu0
      %v425 = vpop.trf.xlu0
      %v426 = vpop.trf.xlu0
      %v427 = vpop.trf.xlu0
      %v428 = vpop.trf.xlu0
      %v429 = vpop.trf.xlu0
      %v430 = vpop.trf.xlu0
      %v431 = vpop.trf.xlu0
      %v432 = vpop.trf.xlu0
      %v433 = vpop.trf.xlu0
      %v434 = vpop.trf.xlu0
      %v435 = vpop.trf.xlu0
      %v436 = vpop.trf.xlu0
      %v437 = vpop.trf.xlu0
      %v438 = vpop.trf.xlu0
      %439 = vxpose.xlu0.b32.start [1/16] %v363, 128
      %440 = vxpose.xlu0.b32.cont [2/16] %v364, 128
      %441 = vxpose.xlu0.b32.cont [3/16] 0.0, 128
      %442 = vxpose.xlu0.b32.cont [4/16] 0.0, 128
      %443 = vxpose.xlu0.b32.cont [5/16] 0.0, 128
      %444 = vxpose.xlu0.b32.cont [6/16] 0.0, 128
      %445 = vxpose.xlu0.b32.cont [7/16] 0.0, 128
      %446 = vxpose.xlu0.b32.cont [8/16] 0.0, 128
      %447 = vxpose.xlu0.b32.cont [9/16] 0.0, 128
      %448 = vxpose.xlu0.b32.cont [10/16] 0.0, 128
      %449 = vxpose.xlu0.b32.cont [11/16] 0.0, 128
      %450 = vxpose.xlu0.b32.cont [12/16] 0.0, 128
      %451 = vxpose.xlu0.b32.cont [13/16] 0.0, 128
      %452 = vxpose.xlu0.b32.cont [14/16] 0.0, 128
      %453 = vxpose.xlu0.b32.cont [15/16] 0.0, 128
      %454 = vxpose.xlu0.b32.end [16/16] 0.0, 128
      %v455 = vpop.trf.xlu0
      %v456 = vpop.trf.xlu0
      %v457 = vpop.trf.xlu0
      %v458 = vpop.trf.xlu0
      %v459 = vpop.trf.xlu0
      %v460 = vpop.trf.xlu0
      %v461 = vpop.trf.xlu0
      %v462 = vpop.trf.xlu0
      %v463 = vpop.trf.xlu0
      %v464 = vpop.trf.xlu0
      %v465 = vpop.trf.xlu0
      %v466 = vpop.trf.xlu0
      %v467 = vpop.trf.xlu0
      %v468 = vpop.trf.xlu0
      %v469 = vpop.trf.xlu0
      %v470 = vpop.trf.xlu0
      %471 = vxpose.xlu0.b32.start [1/16] %v365, 128
      %472 = vxpose.xlu0.b32.cont [2/16] %v366, 128
      %473 = vxpose.xlu0.b32.cont [3/16] 0.0, 128
      %474 = vxpose.xlu0.b32.cont [4/16] 0.0, 128
      %475 = vxpose.xlu0.b32.cont [5/16] 0.0, 128
      %476 = vxpose.xlu0.b32.cont [6/16] 0.0, 128
      %477 = vxpose.xlu0.b32.cont [7/16] 0.0, 128
      %478 = vxpose.xlu0.b32.cont [8/16] 0.0, 128
      %479 = vxpose.xlu0.b32.cont [9/16] 0.0, 128
      %480 = vxpose.xlu0.b32.cont [10/16] 0.0, 128
      %481 = vxpose.xlu0.b32.cont [11/16] 0.0, 128
      %482 = vxpose.xlu0.b32.cont [12/16] 0.0, 128
      %483 = vxpose.xlu0.b32.cont [13/16] 0.0, 128
      %484 = vxpose.xlu0.b32.cont [14/16] 0.0, 128
      %485 = vxpose.xlu0.b32.cont [15/16] 0.0, 128
      %486 = vxpose.xlu0.b32.end [16/16] 0.0, 128
      %v487 = vpop.trf.xlu0
      %v488 = vpop.trf.xlu0
      %v489 = vpop.trf.xlu0
      %v490 = vpop.trf.xlu0
      %v491 = vpop.trf.xlu0
      %v492 = vpop.trf.xlu0
      %v493 = vpop.trf.xlu0
      %v494 = vpop.trf.xlu0
      %v495 = vpop.trf.xlu0
      %v496 = vpop.trf.xlu0
      %v497 = vpop.trf.xlu0
      %v498 = vpop.trf.xlu0
      %v499 = vpop.trf.xlu0
      %v500 = vpop.trf.xlu0
      %v501 = vpop.trf.xlu0
      %v502 = vpop.trf.xlu0
      %503 = vxpose.xlu0.b32.start [1/16] %v367, 128
      %504 = vxpose.xlu0.b32.cont [2/16] %v368, 128
      %505 = vxpose.xlu0.b32.cont [3/16] 0.0, 128
      %506 = vxpose.xlu0.b32.cont [4/16] 0.0, 128
      %507 = vxpose.xlu0.b32.cont [5/16] 0.0, 128
      %508 = vxpose.xlu0.b32.cont [6/16] 0.0, 128
      %509 = vxpose.xlu0.b32.cont [7/16] 0.0, 128
      %510 = vxpose.xlu0.b32.cont [8/16] 0.0, 128
      %511 = vxpose.xlu0.b32.cont [9/16] 0.0, 128
      %512 = vxpose.xlu0.b32.cont [10/16] 0.0, 128
      %513 = vxpose.xlu0.b32.cont [11/16] 0.0, 128
      %514 = vxpose.xlu0.b32.cont [12/16] 0.0, 128
      %515 = vxpose.xlu0.b32.cont [13/16] 0.0, 128
      %516 = vxpose.xlu0.b32.cont [14/16] 0.0, 128
      %517 = vxpose.xlu0.b32.cont [15/16] 0.0, 128
      %518 = vxpose.xlu0.b32.end [16/16] 0.0, 128
      %v519 = vpop.trf.xlu0
      %v520 = vpop.trf.xlu0
      %v521 = vpop.trf.xlu0
      %v522 = vpop.trf.xlu0
      %v523 = vpop.trf.xlu0
      %v524 = vpop.trf.xlu0
      %v525 = vpop.trf.xlu0
      %v526 = vpop.trf.xlu0
      %v527 = vpop.trf.xlu0
      %v528 = vpop.trf.xlu0
      %v529 = vpop.trf.xlu0
      %v530 = vpop.trf.xlu0
      %v531 = vpop.trf.xlu0
      %v532 = vpop.trf.xlu0
      %v533 = vpop.trf.xlu0
      %v534 = vpop.trf.xlu0
      %535 = vxpose.xlu0.b32.start [1/16] %v369, 128
      %536 = vxpose.xlu0.b32.cont [2/16] %v370, 128
      %537 = vxpose.xlu0.b32.cont [3/16] 0.0, 128
      %538 = vxpose.xlu0.b32.cont [4/16] 0.0, 128
      %539 = vxpose.xlu0.b32.cont [5/16] 0.0, 128
      %540 = vxpose.xlu0.b32.cont [6/16] 0.0, 128
      %541 = vxpose.xlu0.b32.cont [7/16] 0.0, 128
      %542 = vxpose.xlu0.b32.cont [8/16] 0.0, 128
      %543 = vxpose.xlu0.b32.cont [9/16] 0.0, 128
      %544 = vxpose.xlu0.b32.cont [10/16] 0.0, 128
      %545 = vxpose.xlu0.b32.cont [11/16] 0.0, 128
      %546 = vxpose.xlu0.b32.cont [12/16] 0.0, 128
      %547 = vxpose.xlu0.b32.cont [13/16] 0.0, 128
      %548 = vxpose.xlu0.b32.cont [14/16] 0.0, 128
      %549 = vxpose.xlu0.b32.cont [15/16] 0.0, 128
      %550 = vxpose.xlu0.b32.end [16/16] 0.0, 128
      %v551 = vpop.trf.xlu0
      %v552 = vpop.trf.xlu0
      %v553 = vpop.trf.xlu0
      %v554 = vpop.trf.xlu0
      %v555 = vpop.trf.xlu0
      %v556 = vpop.trf.xlu0
      %v557 = vpop.trf.xlu0
      %v558 = vpop.trf.xlu0
      %v559 = vpop.trf.xlu0
      %v560 = vpop.trf.xlu0
      %v561 = vpop.trf.xlu0
      %v562 = vpop.trf.xlu0
      %v563 = vpop.trf.xlu0
      %v564 = vpop.trf.xlu0
      %v565 = vpop.trf.xlu0
      %v566 = vpop.trf.xlu0
      %567 = vxpose.xlu0.b32.start [1/16] %v371, 128
      %568 = vxpose.xlu0.b32.cont [2/16] %v372, 128
      %569 = vxpose.xlu0.b32.cont [3/16] 0.0, 128
      %570 = vxpose.xlu0.b32.cont [4/16] 0.0, 128
      %571 = vxpose.xlu0.b32.cont [5/16] 0.0, 128
      %572 = vxpose.xlu0.b32.cont [6/16] 0.0, 128
      %573 = vxpose.xlu0.b32.cont [7/16] 0.0, 128
      %574 = vxpose.xlu0.b32.cont [8/16] 0.0, 128
      %575 = vxpose.xlu0.b32.cont [9/16] 0.0, 128
      %576 = vxpose.xlu0.b32.cont [10/16] 0.0, 128
      %577 = vxpose.xlu0.b32.cont [11/16] 0.0, 128
      %578 = vxpose.xlu0.b32.cont [12/16] 0.0, 128
      %579 = vxpose.xlu0.b32.cont [13/16] 0.0, 128
      %580 = vxpose.xlu0.b32.cont [14/16] 0.0, 128
      %581 = vxpose.xlu0.b32.cont [15/16] 0.0, 128
      %582 = vxpose.xlu0.b32.end [16/16] 0.0, 128
      %v583 = vpop.trf.xlu0
      %v584 = vpop.trf.xlu0
      %v585 = vpop.trf.xlu0
      %v586 = vpop.trf.xlu0
      %v587 = vpop.trf.xlu0
      %v588 = vpop.trf.xlu0
      %v589 = vpop.trf.xlu0
      %v590 = vpop.trf.xlu0
      %v591 = vpop.trf.xlu0
      %v592 = vpop.trf.xlu0
      %v593 = vpop.trf.xlu0
      %v594 = vpop.trf.xlu0
      %v595 = vpop.trf.xlu0
      %v596 = vpop.trf.xlu0
      %v597 = vpop.trf.xlu0
      %v598 = vpop.trf.xlu0
      %599 = vxpose.xlu0.b32.start [1/16] %v373, 128
      %600 = vxpose.xlu0.b32.cont [2/16] %v374, 128
      %601 = vxpose.xlu0.b32.cont [3/16] 0.0, 128
      %602 = vxpose.xlu0.b32.cont [4/16] 0.0, 128
      %603 = vxpose.xlu0.b32.cont [5/16] 0.0, 128
      %604 = vxpose.xlu0.b32.cont [6/16] 0.0, 128
      %605 = vxpose.xlu0.b32.cont [7/16] 0.0, 128
      %606 = vxpose.xlu0.b32.cont [8/16] 0.0, 128
      %607 = vxpose.xlu0.b32.cont [9/16] 0.0, 128
      %608 = vxpose.xlu0.b32.cont [10/16] 0.0, 128
      %609 = vxpose.xlu0.b32.cont [11/16] 0.0, 128
      %610 = vxpose.xlu0.b32.cont [12/16] 0.0, 128
      %611 = vxpose.xlu0.b32.cont [13/16] 0.0, 128
      %612 = vxpose.xlu0.b32.cont [14/16] 0.0, 128
      %613 = vxpose.xlu0.b32.cont [15/16] 0.0, 128
      %614 = vxpose.xlu0.b32.end [16/16] 0.0, 128
      %v615 = vpop.trf.xlu0
      %v616 = vpop.trf.xlu0
      %v617 = vpop.trf.xlu0
      %v618 = vpop.trf.xlu0
      %v619 = vpop.trf.xlu0
      %v620 = vpop.trf.xlu0
      %v621 = vpop.trf.xlu0
      %v622 = vpop.trf.xlu0
      %v623 = vpop.trf.xlu0
      %v624 = vpop.trf.xlu0
      %v625 = vpop.trf.xlu0
      %v626 = vpop.trf.xlu0
      %v627 = vpop.trf.xlu0
      %v628 = vpop.trf.xlu0
      %v629 = vpop.trf.xlu0
      %v630 = vpop.trf.xlu0
      %v631 = vlaneseq
      %v632 = vshrl.u32 %v631, 7
      %v633 = vadd.s32 %v632, 8
      %v634 = vlaneseq
      %v635 = vand.u32 %v634, 127
      %vm636 = vcmp.ge.s32.totalorder %v632, %v635
      %vm637 = vcmp.ge.s32.totalorder %v633, %v635
      %v638 = vsel %vm636, 1, 0
      %v639 = vsel %vm637, 1, 0
      %vm640 = vcmp.eq.s32.totalorder %v638, 1
      %vm641 = vcmp.eq.s32.totalorder %v639, 1
      %v642 = vsel %vm640, %v359, %v391
      %v643 = vsel %vm641, %v360, %v392
      %v644 = vsel %vm640, %v361, %v423
      %v645 = vsel %vm641, %v362, %v424
      %v646 = vsel %vm640, %v363, %v455
      %v647 = vsel %vm641, %v364, %v456
      %v648 = vsel %vm640, %v365, %v487
      %v649 = vsel %vm641, %v366, %v488
      %v650 = vsel %vm640, %v367, %v519
      %v651 = vsel %vm641, %v368, %v520
      %v652 = vsel %vm640, %v369, %v551
      %v653 = vsel %vm641, %v370, %v552
      %v654 = vsel %vm640, %v371, %v583
      %v655 = vsel %vm641, %v372, %v584
      %v656 = vsel %vm640, %v373, %v615
      %v657 = vsel %vm641, %v374, %v616
      %vm658 = vcmask 130048
      %659 = vst.msk [vmem:[#allocation5] sm:$0xff] %vm658, %v642
      %660 = vst.msk [vmem:[#allocation5 + $0x8] sm:$0xff] %vm658, %v643
      %661 = vst.msk [vmem:[#allocation5 + $0x10] sm:$0xff] %vm658, %v644
      %662 = vst.msk [vmem:[#allocation5 + $0x18] sm:$0xff] %vm658, %v645
      %663 = vst.msk [vmem:[#allocation5 + $0x20] sm:$0xff] %vm658, %v646
      %664 = vst.msk [vmem:[#allocation5 + $0x28] sm:$0xff] %vm658, %v647
      %665 = vst.msk [vmem:[#allocation5 + $0x30] sm:$0xff] %vm658, %v648
      %666 = vst.msk [vmem:[#allocation5 + $0x38] sm:$0xff] %vm658, %v649
      %667 = vst.msk [vmem:[#allocation5 + $0x40] sm:$0xff] %vm658, %v650
      %668 = vst.msk [vmem:[#allocation5 + $0x48] sm:$0xff] %vm658, %v651
      %669 = vst.msk [vmem:[#allocation5 + $0x50] sm:$0xff] %vm658, %v652
      %670 = vst.msk [vmem:[#allocation5 + $0x58] sm:$0xff] %vm658, %v653
      %671 = vst.msk [vmem:[#allocation5 + $0x60] sm:$0xff] %vm658, %v654
      %672 = vst.msk [vmem:[#allocation5 + $0x68] sm:$0xff] %vm658, %v655
      %673 = vst.msk [vmem:[#allocation5 + $0x70] sm:$0xff] %vm658, %v656
      %674 = vst.msk [vmem:[#allocation5 + $0x78] sm:$0xff] %vm658, %v657
    $region21: #{tpu_custom_call.1} parent=1 // pred_fallthru
      _
    // Predicated region
    $region22: #{tpu_custom_call.1} parent=1 // pred_check
      _
    $region23: #{tpu_custom_call.1} parent=1 // pred_check_branch
      %676 = sbr.rel (0) target = $region25
    $region24: #{tpu_custom_call.1} parent=1 // pred_region
      %678 = vsyncadd [#allocation4], 0
      %s679 = sshll.u32 [#allocation5], 4
      %s680 = int_to_ptr.vmem [resolvable:$true] %s679
      %s681 = sshll.u32 %s1, 4
      %s682 = int_to_ptr.hbm [resolvable:$true] %s681
      %687 = dma.vmem_to_hbm [thread:$0]  %s680, 2048, %s682, [#allocation4], 128, 128, 8
    $region25: #{tpu_custom_call.1} parent=1 // pred_fallthru
      _
    // Predicated region
    $region26: #{tpu_custom_call.1} parent=1 // pred_check
      _
    $region27: #{tpu_custom_call.1} parent=1 // pred_check_branch
      %689 = sbr.rel (0) target = $region29
    $region28: #{tpu_custom_call.1} parent=1 // pred_region
      %691 = dma.done [#allocation4], 2048
    $region29: #{tpu_custom_call.1} parent=1 // pred_fallthru
      _
    %692 = vsyncpa [#allocation3], 1
    %693 = vsyncpa [#allocation4], 1

</llo_original>
